<compile_context>
chip_gen: v7x
topology: tpu7x:2x2x1
jax: 0.10.0
libtpu: 0.0.40
codegen_flags: <defaults>
</compile_context>

<pallas_src>
import jax
import jax.numpy as jnp
from jax import lax
from jax.experimental import pallas as pl
from jax.experimental.pallas import tpu as pltpu


def transition_kernel(x_ref, scale_ref, bias_ref, w_ref, b_ref, pool_ref, o_ref):
    # x_ref:     (B_blk, Cin, Lin)   Lin = 2*tile_rows*W lanes
    # scale_ref: (Cin, 1)            folded BN scale = gamma / sqrt(var + eps)
    # bias_ref:  (Cin, 1)            folded BN bias  = beta - mean * scale
    # w_ref:     (Cout, Cin)         1x1 conv weight (MXU dtype)
    # b_ref:     (Cout, 1)           conv bias (f32)
    # pool_ref:  (Lin, Lout)         tile-local 2x2 avg-pool factor (MXU dtype)
    # o_ref:     (B_blk, Cout, Lout) Lout = tile_rows*W2
    def body(i, carry):
        # Elementwise stage runs in the dtype of scale/bias (f32, or bf16 on
        # chips with bf16 VALUs); the casts below are no-ops when dtypes match.
        x = x_ref[i].astype(scale_ref.dtype)
        h = jnp.maximum(x * scale_ref[...] + bias_ref[...], 0.0)
        # 1x1 conv on the MXU, f32 accumulation.
        y = jnp.dot(w_ref[...], h.astype(w_ref.dtype),
                    preferred_element_type=jnp.float32)
        # 2x2 / stride-2 average pool as a small tile-local matmul.
        p = jnp.dot(y.astype(pool_ref.dtype), pool_ref[...],
                    preferred_element_type=jnp.float32)
        # Conv bias after pooling (pool columns sum to 1 -> mathematically exact).
        o_ref[i] = (p + b_ref[...]).astype(o_ref.dtype)
        return carry

    lax.fori_loop(0, x_ref.shape[0], body, 0, unroll=True)


def _pick_row_tile(h2, w, w2, max_out_lanes=256):
    """How many pooled output rows each grid step handles.

    Prefers divisors of h2 whose input/output lane extents are 128-aligned
    (unmasked vst, clean vregs); among those, the largest whose pooled output
    lane extent stays <= max_out_lanes so the tile-local pool factor remains
    small and VMEM-resident.  Falls back to any divisor, then to a single
    row-pair (pool factor (2W, W2)) for very wide feature maps.
    """
    aligned, any_div = [], []
    for t in range(1, h2 + 1):
        if h2 % t:
            continue
        lin, lout = 2 * t * w, t * w2
        any_div.append((t, lout))
        if t == h2 or (lin % 128 == 0 and lout % 128 == 0):
            aligned.append((t, lout))
    for group in (aligned, any_div):
        fits = [t for t, lout in group if lout <= max_out_lanes]
        if fits:
            return max(fits)
    return 1


def _pick_batch_block(n, per_image_bytes, target_step_bytes, max_batch_block):
    """Largest divisor of n (<= max_batch_block) whose x payload fits target."""
    best = 1
    for d in range(1, min(n, max_batch_block) + 1):
        if n % d:
            continue
        if d == 1 or d * per_image_bytes <= target_step_bytes:
            best = d
    return best


def _bf16_vpu_available():
    """Conservative: only claim bf16 VALUs on v6/v7 chips."""
    try:
        kind = jax.devices()[0].device_kind.lower()
    except Exception:
        return False
    return ("v6" in kind) or ("v7" in kind)


def transition_block(x_nchw, gamma, beta, running_mean, running_var,
                     conv_w, conv_b, eps=1e-5, max_out_lanes=256,
                     max_batch_block=8, target_step_bytes=3 << 20):
    N, Cin, H, W = x_nchw.shape
    Cout = conv_w.shape[0]
    assert H % 2 == 0 and W % 2 == 0, "AvgPool2d(2,2) tiling assumes even H, W"
    H2, W2 = H // 2, W // 2

    in_dt = x_nchw.dtype
    # MXU operand dtype follows the input dtype: bf16 activations stay bf16 on
    # the MXU (f32 accumulate); f32 inputs keep full precision.
    mxu_dt = jnp.bfloat16 if in_dt == jnp.bfloat16 else jnp.float32
    # Elementwise (VPU) dtype: bf16 only when the input is bf16 AND the chip
    # has bf16 VALUs (v6e/v7x); otherwise f32.
    vpu_dt = mxu_dt if (in_dt == jnp.bfloat16 and _bf16_vpu_available()) \
        else jnp.float32

    tr = _pick_row_tile(H2, W, W2, max_out_lanes)   # pooled rows per grid step
    lin, lout = 2 * tr * W, tr * W2                 # lane extents per step
    n_tiles = H2 // tr

    # Batch block: amortize per-grid-step overhead by carrying several images
    # per step (payload target a few MB; VMEM stays tiny when double-buffered).
    per_image_bytes = Cin * lin * jnp.dtype(in_dt).itemsize
    bb = _pick_batch_block(N, per_image_bytes, target_step_bytes, max_batch_block)
    n_bblk = N // bb

    # --- parameter folding / small constants (plain JAX, negligible) ---
    inv = (gamma.astype(jnp.float32)
           / jnp.sqrt(running_var.astype(jnp.float32) + eps))
    scale = inv.reshape(Cin, 1).astype(vpu_dt)
    bias = (beta.astype(jnp.float32)
            - running_mean.astype(jnp.float32) * inv).reshape(Cin, 1).astype(vpu_dt)
    w = conv_w.reshape(Cout, Cin).astype(mxu_dt)
    b = conv_b.reshape(Cout, 1).astype(jnp.float32)

    # Tile-local pool factor: within a tile of 2*tr input rows, flat index
    # rr*W + cc  ->  (rr//2)*W2 + (cc//2) with weight 0.25.  Identical for every
    # tile (tiles start on even rows), so one small constant-index_map array
    # serves all grid steps.
    m = jnp.arange(lin)
    rr, cc = m // W, m % W
    dst = (rr // 2) * W2 + (cc // 2)
    pool = (dst[:, None] == jnp.arange(lout)[None, :]).astype(mxu_dt) * 0.25

    # Flatten spatial dims onto the lane axis (free, contiguous reshape).
    # NOTE: no dtype cast here -- the kernel casts on load.
    x3 = x_nchw.reshape(N, Cin, H * W)

    out = pl.pallas_call(
        transition_kernel,
        out_shape=jax.ShapeDtypeStruct((N, Cout, H2 * W2), in_dt),
        grid_spec=pltpu.PrefetchScalarGridSpec(
            num_scalar_prefetch=0,
            grid=(n_bblk, n_tiles),
            in_specs=[
                pl.BlockSpec((bb, Cin, lin), lambda n, r: (n, 0, r)),
                pl.BlockSpec((Cin, 1), lambda n, r: (0, 0)),
                pl.BlockSpec((Cin, 1), lambda n, r: (0, 0)),
                pl.BlockSpec((Cout, Cin), lambda n, r: (0, 0)),
                pl.BlockSpec((Cout, 1), lambda n, r: (0, 0)),
                pl.BlockSpec((lin, lout), lambda n, r: (0, 0)),
            ],
            out_specs=pl.BlockSpec((bb, Cout, lout), lambda n, r: (n, 0, r)),
        ),
        compiler_params=pltpu.CompilerParams(
            dimension_semantics=("parallel", "parallel")),
    )(x3, scale, bias, w, b, pool)

    return out.reshape(N, Cout, H2, W2)


def reference(x, gamma, beta, mean, var, conv_w, conv_b, eps=1e-5):
    # pure-JAX reference of BN(eval) -> ReLU -> 1x1 conv -> avgpool(2,2)
    inv = gamma / jnp.sqrt(var + eps)
    h = jax.nn.relu((x - mean[None, :, None, None]) * inv[None, :, None, None]
                    + beta[None, :, None, None])
    w2d = conv_w.reshape(conv_w.shape[0], conv_w.shape[1])
    y = jnp.einsum('nchw,dc->ndhw', h, w2d) + conv_b[None, :, None, None]
    N, D, H, W = y.shape
    return y.reshape(N, D, H // 2, 2, W // 2, 2).mean(axis=(3, 5))


if __name__ == "__main__":
    key = jax.random.PRNGKey(0)
    k = jax.random.split(key, 8)

    N, Cin, H, W = 2, 4, 16, 16
    Cout = 2

    x = jax.random.normal(k[0], (N, Cin, H, W), dtype=jnp.float32)

    # deterministic synthetic parameters (shapes from the module __init__)
    gamma = 1.0 + 0.1 * jax.random.normal(k[1], (Cin,), dtype=jnp.float32)
    beta = 0.1 * jax.random.normal(k[2], (Cin,), dtype=jnp.float32)
    running_mean = 0.1 * jax.random.normal(k[3], (Cin,), dtype=jnp.float32)
    running_var = 1.0 + 0.1 * jax.random.uniform(k[4], (Cin,), dtype=jnp.float32)
    conv_w = jax.random.normal(k[5], (Cout, Cin, 1, 1), dtype=jnp.float32) * 0.5
    conv_b = 0.1 * jax.random.normal(k[6], (Cout,), dtype=jnp.float32)

    out = transition_block(x, gamma, beta, running_mean, running_var,
                           conv_w, conv_b)
    out = jax.block_until_ready(out)

    ref = reference(x, gamma, beta, running_mean, running_var, conv_w, conv_b)
    assert out.shape == (N, Cout, H // 2, W // 2)
    assert jnp.allclose(out, ref, atol=1e-5, rtol=1e-5), "mismatch vs reference"

    print("KERNEL_OK")
</pallas_src>

<mosaic_0001>
module attributes {stable_mosaic.version = 11 : i64} {
  func.func @transition_kernel(%arg0: i32, %arg1: i32, %arg2: memref<2x4x256xf32, #tpu.memory_space<vmem>>, %arg3: memref<4x1xf32, #tpu.memory_space<vmem>>, %arg4: memref<4x1xf32, #tpu.memory_space<vmem>>, %arg5: memref<2x4xf32, #tpu.memory_space<vmem>>, %arg6: memref<2x1xf32, #tpu.memory_space<vmem>>, %arg7: memref<256x64xf32, #tpu.memory_space<vmem>>, %arg8: memref<2x2x64xf32, #tpu.memory_space<vmem>>) attributes {dimension_semantics = [#tpu.dimension_semantics<parallel>, #tpu.dimension_semantics<parallel>], iteration_bounds = array<i64: 1, 1>, scalar_prefetch = 0 : i64, scratch_operands = 0 : i64, tpu.core_type = #tpu.core_type<tc>, window_params = [{transform_indices = @transform_0, window_bounds = array<i64: 2, 4, 256>}, {pipeline_mode = #tpu.pipeline_mode<synchronous>, transform_indices = @transform_1, window_bounds = array<i64: 4, 1>}, {pipeline_mode = #tpu.pipeline_mode<synchronous>, transform_indices = @transform_2, window_bounds = array<i64: 4, 1>}, {pipeline_mode = #tpu.pipeline_mode<synchronous>, transform_indices = @transform_3, window_bounds = array<i64: 2, 4>}, {pipeline_mode = #tpu.pipeline_mode<synchronous>, transform_indices = @transform_4, window_bounds = array<i64: 2, 1>}, {pipeline_mode = #tpu.pipeline_mode<synchronous>, transform_indices = @transform_5, window_bounds = array<i64: 256, 64>}, {transform_indices = @transform_6, window_bounds = array<i64: 2, 2, 64>}]} {
    %c0_i32 = arith.constant 0 : i32
    %0 = arith.index_cast %c0_i32 : i32 to index
    %c0 = arith.constant 0 : index
    %c0_0 = arith.constant 0 : index
    %1 = vector.load %arg2[%0, %c0, %c0_0] : memref<2x4x256xf32, #tpu.memory_space<vmem>>, vector<1x4x256xf32>
    %2 = vector.shape_cast %1 : vector<1x4x256xf32> to vector<4x256xf32>
    %c0_1 = arith.constant 0 : index
    %c0_2 = arith.constant 0 : index
    %3 = vector.load %arg3[%c0_1, %c0_2] : memref<4x1xf32, #tpu.memory_space<vmem>>, vector<4x1xf32>
    %4 = vector.broadcast %3 : vector<4x1xf32> to vector<4x256xf32>
    %5 = arith.mulf %2, %4 : vector<4x256xf32>
    %c0_3 = arith.constant 0 : index
    %c0_4 = arith.constant 0 : index
    %6 = vector.load %arg4[%c0_3, %c0_4] : memref<4x1xf32, #tpu.memory_space<vmem>>, vector<4x1xf32>
    %7 = vector.broadcast %6 : vector<4x1xf32> to vector<4x256xf32>
    %8 = arith.addf %5, %7 : vector<4x256xf32>
    %cst = arith.constant 0.000000e+00 : f32
    %9 = vector.broadcast %cst : f32 to vector<4x256xf32>
    %10 = arith.maximumf %8, %9 : vector<4x256xf32>
    %c0_5 = arith.constant 0 : index
    %c0_6 = arith.constant 0 : index
    %11 = vector.load %arg5[%c0_5, %c0_6] : memref<2x4xf32, #tpu.memory_space<vmem>>, vector<2x4xf32>
    %cst_7 = arith.constant dense<0.000000e+00> : vector<2x256xf32>
    %12 = tpu.matmul %11, %10, %cst_7 {dimension_numbers = #tpu.dot_dimension_numbers<[1], [0], [0], [1], [0, 0, 1, 1], [], []>} : vector<2x4xf32>, vector<4x256xf32>, vector<2x256xf32> -> vector<2x256xf32>
    %c0_8 = arith.constant 0 : index
    %c0_9 = arith.constant 0 : index
    %13 = vector.load %arg7[%c0_8, %c0_9] : memref<256x64xf32, #tpu.memory_space<vmem>>, vector<256x64xf32>
    %cst_10 = arith.constant dense<0.000000e+00> : vector<2x64xf32>
    %14 = tpu.matmul %12, %13, %cst_10 {dimension_numbers = #tpu.dot_dimension_numbers<[1], [0], [0], [1], [0, 0, 1, 1], [], []>} : vector<2x256xf32>, vector<256x64xf32>, vector<2x64xf32> -> vector<2x64xf32>
    %c0_11 = arith.constant 0 : index
    %c0_12 = arith.constant 0 : index
    %15 = vector.load %arg6[%c0_11, %c0_12] : memref<2x1xf32, #tpu.memory_space<vmem>>, vector<2x1xf32>
    %16 = vector.broadcast %15 : vector<2x1xf32> to vector<2x64xf32>
    %17 = arith.addf %14, %16 : vector<2x64xf32>
    %18 = arith.index_cast %c0_i32 : i32 to index
    %c0_13 = arith.constant 0 : index
    %c0_14 = arith.constant 0 : index
    %19 = vector.load %arg8[%18, %c0_13, %c0_14] : memref<2x2x64xf32, #tpu.memory_space<vmem>>, vector<1x2x64xf32>
    %20 = vector.shape_cast %19 : vector<1x2x64xf32> to vector<2x64xf32>
    %21 = vector.shape_cast %17 : vector<2x64xf32> to vector<1x2x64xf32>
    tpu.vector_store %arg8[%18, %c0_13, %c0_14], %21 {strides = array<i32>} : memref<2x2x64xf32, #tpu.memory_space<vmem>>, vector<1x2x64xf32>,
    %c1_i32 = arith.constant 1 : i32
    %22 = arith.index_cast %c1_i32 : i32 to index
    %c0_15 = arith.constant 0 : index
    %c0_16 = arith.constant 0 : index
    %23 = vector.load %arg2[%22, %c0_15, %c0_16] : memref<2x4x256xf32, #tpu.memory_space<vmem>>, vector<1x4x256xf32>
    %24 = vector.shape_cast %23 : vector<1x4x256xf32> to vector<4x256xf32>
    %c0_17 = arith.constant 0 : index
    %c0_18 = arith.constant 0 : index
    %25 = vector.load %arg3[%c0_17, %c0_18] : memref<4x1xf32, #tpu.memory_space<vmem>>, vector<4x1xf32>
    %26 = vector.broadcast %25 : vector<4x1xf32> to vector<4x256xf32>
    %27 = arith.mulf %24, %26 : vector<4x256xf32>
    %c0_19 = arith.constant 0 : index
    %c0_20 = arith.constant 0 : index
    %28 = vector.load %arg4[%c0_19, %c0_20] : memref<4x1xf32, #tpu.memory_space<vmem>>, vector<4x1xf32>
    %29 = vector.broadcast %28 : vector<4x1xf32> to vector<4x256xf32>
    %30 = arith.addf %27, %29 : vector<4x256xf32>
    %cst_21 = arith.constant 0.000000e+00 : f32
    %31 = vector.broadcast %cst_21 : f32 to vector<4x256xf32>
    %32 = arith.maximumf %30, %31 : vector<4x256xf32>
    %c0_22 = arith.constant 0 : index
    %c0_23 = arith.constant 0 : index
    %33 = vector.load %arg5[%c0_22, %c0_23] : memref<2x4xf32, #tpu.memory_space<vmem>>, vector<2x4xf32>
    %cst_24 = arith.constant dense<0.000000e+00> : vector<2x256xf32>
    %34 = tpu.matmul %33, %32, %cst_24 {dimension_numbers = #tpu.dot_dimension_numbers<[1], [0], [0], [1], [0, 0, 1, 1], [], []>} : vector<2x4xf32>, vector<4x256xf32>, vector<2x256xf32> -> vector<2x256xf32>
    %c0_25 = arith.constant 0 : index
    %c0_26 = arith.constant 0 : index
    %35 = vector.load %arg7[%c0_25, %c0_26] : memref<256x64xf32, #tpu.memory_space<vmem>>, vector<256x64xf32>
    %cst_27 = arith.constant dense<0.000000e+00> : vector<2x64xf32>
    %36 = tpu.matmul %34, %35, %cst_27 {dimension_numbers = #tpu.dot_dimension_numbers<[1], [0], [0], [1], [0, 0, 1, 1], [], []>} : vector<2x256xf32>, vector<256x64xf32>, vector<2x64xf32> -> vector<2x64xf32>
    %c0_28 = arith.constant 0 : index
    %c0_29 = arith.constant 0 : index
    %37 = vector.load %arg6[%c0_28, %c0_29] : memref<2x1xf32, #tpu.memory_space<vmem>>, vector<2x1xf32>
    %38 = vector.broadcast %37 : vector<2x1xf32> to vector<2x64xf32>
    %39 = arith.addf %36, %38 : vector<2x64xf32>
    %40 = arith.index_cast %c1_i32 : i32 to index
    %c0_30 = arith.constant 0 : index
    %c0_31 = arith.constant 0 : index
    %41 = vector.load %arg8[%40, %c0_30, %c0_31] : memref<2x2x64xf32, #tpu.memory_space<vmem>>, vector<1x2x64xf32>
    %42 = vector.shape_cast %41 : vector<1x2x64xf32> to vector<2x64xf32>
    %43 = vector.shape_cast %39 : vector<2x64xf32> to vector<1x2x64xf32>
    tpu.vector_store %arg8[%40, %c0_30, %c0_31], %43 {strides = array<i32>} : memref<2x2x64xf32, #tpu.memory_space<vmem>>, vector<1x2x64xf32>,
    %c2_i32 = arith.constant 2 : i32
    return
  }
  func.func @transform_0(%arg0: i32, %arg1: i32) -> (i32, i32, i32) {
    %c0_i32 = arith.constant 0 : i32
    %c0_i32_0 = arith.constant 0 : i32
    return %arg0, %c0_i32, %arg1 : i32, i32, i32
  }
  func.func @transform_1(%arg0: i32, %arg1: i32) -> (i32, i32) {
    %c0_i32 = arith.constant 0 : i32
    %c0_i32_0 = arith.constant 0 : i32
    %c0_i32_1 = arith.constant 0 : i32
    return %c0_i32, %c0_i32_0 : i32, i32
  }
  func.func @transform_2(%arg0: i32, %arg1: i32) -> (i32, i32) {
    %c0_i32 = arith.constant 0 : i32
    %c0_i32_0 = arith.constant 0 : i32
    %c0_i32_1 = arith.constant 0 : i32
    return %c0_i32, %c0_i32_0 : i32, i32
  }
  func.func @transform_3(%arg0: i32, %arg1: i32) -> (i32, i32) {
    %c0_i32 = arith.constant 0 : i32
    %c0_i32_0 = arith.constant 0 : i32
    %c0_i32_1 = arith.constant 0 : i32
    return %c0_i32, %c0_i32_0 : i32, i32
  }
  func.func @transform_4(%arg0: i32, %arg1: i32) -> (i32, i32) {
    %c0_i32 = arith.constant 0 : i32
    %c0_i32_0 = arith.constant 0 : i32
    %c0_i32_1 = arith.constant 0 : i32
    return %c0_i32, %c0_i32_0 : i32, i32
  }
  func.func @transform_5(%arg0: i32, %arg1: i32) -> (i32, i32) {
    %c0_i32 = arith.constant 0 : i32
    %c0_i32_0 = arith.constant 0 : i32
    %c0_i32_1 = arith.constant 0 : i32
    return %c0_i32, %c0_i32_0 : i32, i32
  }
  func.func @transform_6(%arg0: i32, %arg1: i32) -> (i32, i32, i32) {
    %c0_i32 = arith.constant 0 : i32
    %c0_i32_0 = arith.constant 0 : i32
    return %arg0, %c0_i32, %arg1 : i32, i32, i32
  }
}

</mosaic_0001>

<llo_original>
// kernel: tpu_custom_call.1
$region0: #{tpu_custom_call.1}
  #allocation0 [shape = 'u32[]', space=smem, size = 0x4, offset = 0x4, fixed_abs, tag = 'smem constant byte address 0x4 - core index']
  #allocation1 [shape = 'u32[144,128]{1,0:T(1,128)}', space=vmem, size = 0x12000, scoped, tag = 'internal scratch']
  %s0 = inlined_call_operand.vmem [shape: f32[2,4,256], index: 0, kind: input, shape index: {}]
  %s1 = inlined_call_operand.vmem [shape: f32[4,1], index: 1, kind: input, shape index: {}]
  %s2 = inlined_call_operand.vmem [shape: f32[4,1], index: 2, kind: input, shape index: {}]
  %s3 = inlined_call_operand.vmem [shape: f32[2,4], index: 3, kind: input, shape index: {}]
  %s4 = inlined_call_operand.vmem [shape: f32[2,1], index: 4, kind: input, shape index: {}]
  %s5 = inlined_call_operand.vmem [shape: f32[256,64], index: 5, kind: input, shape index: {}]
  %s6 = inlined_call_operand.hbm [shape: f32[2,2,64], index: 6, kind: output, shape index: {}]
  %s7 = sld [smem:[#allocation0]]
  $region34: #{tpu_custom_call.1} parent=0
    _
  %s9 = ssub.s32 1, %s7
  %s10 = scalar_select 0, %s9, %s7
  $region1: #{tpu_custom_call.1} parent=0
    #allocation2 [shape = 'u8[2048]{0}', space=vmem, size = 0x800, scoped, tag = 'output window, operand 0, single buffered']
    #allocation3 [shape = 's32[1]{0}', space=sflag, size = 0x4, scoped, tag = 'scoped memory for tpu_custom_call.1']
    %11 = vsyncpa [#allocation3], 0
    // Predicated region
    $region2: #{tpu_custom_call.1} parent=1 // pred_check
      _
    $region3: #{tpu_custom_call.1} parent=1 // pred_check_branch
      %13 = sbr.rel (0) target = $region5
    $region4: #{tpu_custom_call.1} parent=1 // pred_region
      _
    $region5: #{tpu_custom_call.1} parent=1 // pred_fallthru
      _
    // Predicated region
    $region6: #{tpu_custom_call.1} parent=1 // pred_check
      _
    $region7: #{tpu_custom_call.1} parent=1 // pred_check_branch
      %15 = sbr.rel (0) target = $region9
    $region8: #{tpu_custom_call.1} parent=1 // pred_region
      _
    $region9: #{tpu_custom_call.1} parent=1 // pred_fallthru
      _
    // Predicated region
    $region10: #{tpu_custom_call.1} parent=1 // pred_check
      _
    $region11: #{tpu_custom_call.1} parent=1 // pred_check_branch
      %17 = sbr.rel (0) target = $region13
    $region12: #{tpu_custom_call.1} parent=1 // pred_region
      _
    $region13: #{tpu_custom_call.1} parent=1 // pred_fallthru
      _
    // Predicated region
    $region14: #{tpu_custom_call.1} parent=1 // pred_check
      _
    $region15: #{tpu_custom_call.1} parent=1 // pred_check_branch
      %19 = sbr.rel (0) target = $region17
    $region16: #{tpu_custom_call.1} parent=1 // pred_region
      _
    $region17: #{tpu_custom_call.1} parent=1 // pred_fallthru
      _
    // Predicated region
    $region18: #{tpu_custom_call.1} parent=1 // pred_check
      _
    $region19: #{tpu_custom_call.1} parent=1 // pred_check_branch
      %21 = sbr.rel (0) target = $region21
    $region20: #{tpu_custom_call.1} parent=1 // pred_region
      _
    $region21: #{tpu_custom_call.1} parent=1 // pred_fallthru
      _
    // Predicated region
    $region22: #{tpu_custom_call.1} parent=1 // pred_check
      _
    $region23: #{tpu_custom_call.1} parent=1 // pred_check_branch
      %23 = sbr.rel (0) target = $region25
    $region24: #{tpu_custom_call.1} parent=1 // pred_region
      _
    $region25: #{tpu_custom_call.1} parent=1 // pred_fallthru
      _
    %v24 = vld [vmem:[%s0] sm:$0xff]
    %v25 = vld [vmem:[%s1] sm:$0xf]
    %27 = vset.pattern.permute.xlu0 0
    %28 = vperm.xlu0 %27, %v25
    %v29 = vpop.permute.xlu0 %28
    %v31 = vunpack.c.l.s4 839922192
    %v32 = vunpack.c.0.s8 %v31
    %v33 = vlaneseq
    %v34 = vshrl.u32 %v33, 7
    %v35 = vsub.s32 %v32, %v34
    %v36 = vrot.slane %v29, %v35
    %v38 = vmul.f32 %v24, %v36
    %v39 = vld [vmem:[%s2] sm:$0xf]
    %41 = vset.pattern.permute.xlu0 0
    %42 = vperm.xlu0 %41, %v39
    %v43 = vpop.permute.xlu0 %42
    %v45 = vunpack.c.l.s4 839922192
    %v46 = vunpack.c.0.s8 %v45
    %v47 = vlaneseq
    %v48 = vshrl.u32 %v47, 7
    %v49 = vsub.s32 %v46, %v48
    %v50 = vrot.slane %v43, %v49
    %v52 = vadd.f32 %v38, %v50
    %v53 = vmax.f32 %v52, 0.0
    %v54 = vld [vmem:[%s3] sm:$0x3]
    %v56 = vcombine.high %v53, %v53
    %vm57 = vcmask 31744
    %v59 = vsel %vm57, %v54, 0
    %vm61 = vcmask 1043456
    %v62 = vsel %vm61, %v53, 0
    %v64 = vsel %vm61, %v56, 0
    %66 = vmatprep.subr.mxu0 %v64
    %67 = vmatpush1.msra.mxu0 %v62
    %68 = vmatprep.subr.mxu0 0.0
    %69 = vmatpush1.msra.mxu0 0.0
    %70 = vmatprep.subr.mxu0 0.0
    %71 = vmatpush1.msra.mxu0 0.0
    %72 = vmatprep.subr.mxu0 0.0
    %73 = vmatpush1.msra.mxu0 0.0
    %74 = vmatprep.subr.mxu0 0.0
    %75 = vmatpush1.msra.mxu0 0.0
    %76 = vmatprep.subr.mxu0 0.0
    %77 = vmatpush1.msra.mxu0 0.0
    %78 = vmatprep.subr.mxu0 0.0
    %79 = vmatpush1.msra.mxu0 0.0
    %80 = vmatprep.subr.mxu0 0.0
    %81 = vmatpush1.msra.mxu0 0.0
    %82 = vmatprep.subr.mxu0 0.0
    %83 = vmatpush1.msra.mxu0 0.0
    %84 = vmatprep.subr.mxu0 0.0
    %85 = vmatpush1.msra.mxu0 0.0
    %86 = vmatprep.subr.mxu0 0.0
    %87 = vmatpush1.msra.mxu0 0.0
    %88 = vmatprep.subr.mxu0 0.0
    %89 = vmatpush1.msra.mxu0 0.0
    %90 = vmatprep.subr.mxu0 0.0
    %91 = vmatpush1.msra.mxu0 0.0
    %92 = vmatprep.subr.mxu0 0.0
    %93 = vmatpush1.msra.mxu0 0.0
    %94 = vmatprep.subr.mxu0 0.0
    %95 = vmatpush1.msra.mxu0 0.0
    %96 = vmatprep.subr.mxu0 0.0
    %97 = vmatpush1.msra.mxu0 0.0
    %98 = vmatprep.subr.mxu0 0.0
    %99 = vmatpush1.msra.mxu0 0.0
    %100 = vmatprep.subr.mxu0 0.0
    %101 = vmatpush1.msra.mxu0 0.0
    %102 = vmatprep.subr.mxu0 0.0
    %103 = vmatpush1.msra.mxu0 0.0
    %104 = vmatprep.subr.mxu0 0.0
    %105 = vmatpush1.msra.mxu0 0.0
    %106 = vmatprep.subr.mxu0 0.0
    %107 = vmatpush1.msra.mxu0 0.0
    %108 = vmatprep.subr.mxu0 0.0
    %109 = vmatpush1.msra.mxu0 0.0
    %110 = vmatprep.subr.mxu0 0.0
    %111 = vmatpush1.msra.mxu0 0.0
    %112 = vmatprep.subr.mxu0 0.0
    %113 = vmatpush1.msra.mxu0 0.0
    %114 = vmatprep.subr.mxu0 0.0
    %115 = vmatpush1.msra.mxu0 0.0
    %116 = vmatprep.subr.mxu0 0.0
    %117 = vmatpush1.msra.mxu0 0.0
    %118 = vmatprep.subr.mxu0 0.0
    %119 = vmatpush1.msra.mxu0 0.0
    %120 = vmatprep.subr.mxu0 0.0
    %121 = vmatpush1.msra.mxu0 0.0
    %122 = vmatprep.subr.mxu0 0.0
    %123 = vmatpush1.msra.mxu0 0.0
    %124 = vmatprep.subr.mxu0 0.0
    %125 = vmatpush1.msra.mxu0 0.0
    %126 = vmatprep.subr.mxu0 0.0
    %127 = vmatpush1.msra.mxu0 0.0
    %128 = vmatprep.subr.mxu0 0.0
    %129 = vmatpush1.msra.mxu0 0.0
    %130 = vmatprep.mubr.f32.mxu0 0.0
    %131 = vmatmul.mubr.f32.gmra.mrb[0].mxu0 %v59
    %v132 = vpop.f32.mrb[0].mxu0
    %v133 = vadd.f32 0.0, %v132
    %v134 = vpop.f32.mrb[0].mxu0
    %v135 = vadd.f32 0.0, %v134
    %136 = vdwg.mxu0
    %v137 = vld [vmem:[%s5] sm:$0xff]
    %v138 = vld [vmem:[%s5 + $0x8] sm:$0xff]
    %v139 = vld [vmem:[%s5 + $0x10] sm:$0xff]
    %v140 = vld [vmem:[%s5 + $0x18] sm:$0xff]
    %v141 = vld [vmem:[%s5 + $0x20] sm:$0xff]
    %v142 = vld [vmem:[%s5 + $0x28] sm:$0xff]
    %v143 = vld [vmem:[%s5 + $0x30] sm:$0xff]
    %v144 = vld [vmem:[%s5 + $0x38] sm:$0xff]
    %v145 = vld [vmem:[%s5 + $0x40] sm:$0xff]
    %v146 = vld [vmem:[%s5 + $0x48] sm:$0xff]
    %v147 = vld [vmem:[%s5 + $0x50] sm:$0xff]
    %v148 = vld [vmem:[%s5 + $0x58] sm:$0xff]
    %v149 = vld [vmem:[%s5 + $0x60] sm:$0xff]
    %v150 = vld [vmem:[%s5 + $0x68] sm:$0xff]
    %v151 = vld [vmem:[%s5 + $0x70] sm:$0xff]
    %v152 = vld [vmem:[%s5 + $0x78] sm:$0xff]
    %v153 = vld [vmem:[%s5 + $0x80] sm:$0xff]
    %v154 = vld [vmem:[%s5 + $0x88] sm:$0xff]
    %v155 = vld [vmem:[%s5 + $0x90] sm:$0xff]
    %v156 = vld [vmem:[%s5 + $0x98] sm:$0xff]
    %v157 = vld [vmem:[%s5 + $0xa0] sm:$0xff]
    %v158 = vld [vmem:[%s5 + $0xa8] sm:$0xff]
    %v159 = vld [vmem:[%s5 + $0xb0] sm:$0xff]
    %v160 = vld [vmem:[%s5 + $0xb8] sm:$0xff]
    %v161 = vld [vmem:[%s5 + $0xc0] sm:$0xff]
    %v162 = vld [vmem:[%s5 + $0xc8] sm:$0xff]
    %v163 = vld [vmem:[%s5 + $0xd0] sm:$0xff]
    %v164 = vld [vmem:[%s5 + $0xd8] sm:$0xff]
    %v165 = vld [vmem:[%s5 + $0xe0] sm:$0xff]
    %v166 = vld [vmem:[%s5 + $0xe8] sm:$0xff]
    %v167 = vld [vmem:[%s5 + $0xf0] sm:$0xff]
    %v168 = vld [vmem:[%s5 + $0xf8] sm:$0xff]
    %v169 = vld [vmem:[%s4] sm:$0x3]
    %171 = vset.pattern.permute.xlu0 0
    %172 = vperm.xlu0 %171, %v169
    %v173 = vpop.permute.xlu0 %172
    %175 = vmatprep.subr.mxu0 0.0
    %176 = vmatpush1.msra.mxu0 %v137
    %177 = vmatprep.subr.mxu0 0.0
    %178 = vmatpush1.msra.mxu0 %v138
    %179 = vmatprep.subr.mxu0 0.0
    %180 = vmatpush1.msra.mxu0 %v139
    %181 = vmatprep.subr.mxu0 0.0
    %182 = vmatpush1.msra.mxu0 %v140
    %183 = vmatprep.subr.mxu0 0.0
    %184 = vmatpush1.msra.mxu0 %v141
    %185 = vmatprep.subr.mxu0 0.0
    %186 = vmatpush1.msra.mxu0 %v142
    %187 = vmatprep.subr.mxu0 0.0
    %188 = vmatpush1.msra.mxu0 %v143
    %189 = vmatprep.subr.mxu0 0.0
    %190 = vmatpush1.msra.mxu0 %v144
    %191 = vmatprep.subr.mxu0 0.0
    %192 = vmatpush1.msra.mxu0 %v145
    %193 = vmatprep.subr.mxu0 0.0
    %194 = vmatpush1.msra.mxu0 %v146
    %195 = vmatprep.subr.mxu0 0.0
    %196 = vmatpush1.msra.mxu0 %v147
    %197 = vmatprep.subr.mxu0 0.0
    %198 = vmatpush1.msra.mxu0 %v148
    %199 = vmatprep.subr.mxu0 0.0
    %200 = vmatpush1.msra.mxu0 %v149
    %201 = vmatprep.subr.mxu0 0.0
    %202 = vmatpush1.msra.mxu0 %v150
    %203 = vmatprep.subr.mxu0 0.0
    %204 = vmatpush1.msra.mxu0 %v151
    %205 = vmatprep.subr.mxu0 0.0
    %206 = vmatpush1.msra.mxu0 %v152
    %207 = vmatprep.subr.mxu0 0.0
    %208 = vmatpush1.msra.mxu0 %v153
    %209 = vmatprep.subr.mxu0 0.0
    %210 = vmatpush1.msra.mxu0 %v154
    %211 = vmatprep.subr.mxu0 0.0
    %212 = vmatpush1.msra.mxu0 %v155
    %213 = vmatprep.subr.mxu0 0.0
    %214 = vmatpush1.msra.mxu0 %v156
    %215 = vmatprep.subr.mxu0 0.0
    %216 = vmatpush1.msra.mxu0 %v157
    %217 = vmatprep.subr.mxu0 0.0
    %218 = vmatpush1.msra.mxu0 %v158
    %219 = vmatprep.subr.mxu0 0.0
    %220 = vmatpush1.msra.mxu0 %v159
    %221 = vmatprep.subr.mxu0 0.0
    %222 = vmatpush1.msra.mxu0 %v160
    %223 = vmatprep.subr.mxu0 0.0
    %224 = vmatpush1.msra.mxu0 %v161
    %225 = vmatprep.subr.mxu0 0.0
    %226 = vmatpush1.msra.mxu0 %v162
    %227 = vmatprep.subr.mxu0 0.0
    %228 = vmatpush1.msra.mxu0 %v163
    %229 = vmatprep.subr.mxu0 0.0
    %230 = vmatpush1.msra.mxu0 %v164
    %231 = vmatprep.subr.mxu0 0.0
    %232 = vmatpush1.msra.mxu0 %v165
    %233 = vmatprep.subr.mxu0 0.0
    %234 = vmatpush1.msra.mxu0 %v166
    %235 = vmatprep.subr.mxu0 0.0
    %236 = vmatpush1.msra.mxu0 %v167
    %237 = vmatprep.subr.mxu0 0.0
    %238 = vmatpush1.msra.mxu0 %v168
    %239 = vmatprep.mubr.f32.mxu0 %v135
    %240 = vmatmul.mubr.f32.gmra.mrb[0].mxu0 %v133
    %v241 = vpop.f32.mrb[0].mxu0
    %v242 = vadd.f32 %v173, %v241
    %v243 = vpop.f32.mrb[0].mxu0
    %244 = vdwg.mxu0
    %vm245 = vcmask 517120
    %246 = vst.msk [vmem:[#allocation2] sm:$0x3] %vm245, %v242
    %s247 = scalar_lea.vmem %s0, 8
    %v248 = vld [vmem:[%s247] sm:$0xff]
    %v249 = vld [vmem:[%s1] sm:$0xf]
    %251 = vset.pattern.permute.xlu0 0
    %252 = vperm.xlu0 %251, %v249
    %v253 = vpop.permute.xlu0 %252
    %v255 = vunpack.c.l.s4 839922192
    %v256 = vunpack.c.0.s8 %v255
    %v257 = vlaneseq
    %v258 = vshrl.u32 %v257, 7
    %v259 = vsub.s32 %v256, %v258
    %v260 = vrot.slane %v253, %v259
    %v262 = vmul.f32 %v248, %v260
    %v263 = vld [vmem:[%s2] sm:$0xf]
    %265 = vset.pattern.permute.xlu0 0
    %266 = vperm.xlu0 %265, %v263
    %v267 = vpop.permute.xlu0 %266
    %v269 = vunpack.c.l.s4 839922192
    %v270 = vunpack.c.0.s8 %v269
    %v271 = vlaneseq
    %v272 = vshrl.u32 %v271, 7
    %v273 = vsub.s32 %v270, %v272
    %v274 = vrot.slane %v267, %v273
    %v276 = vadd.f32 %v262, %v274
    %v277 = vmax.f32 %v276, 0.0
    %v278 = vld [vmem:[%s3] sm:$0x3]
    %v280 = vcombine.high %v277, %v277
    %v282 = vsel %vm57, %v278, 0
    %v284 = vsel %vm61, %v277, 0
    %v286 = vsel %vm61, %v280, 0
    %288 = vmatprep.subr.mxu0 %v286
    %289 = vmatpush1.msra.mxu0 %v284
    %290 = vmatprep.subr.mxu0 0.0
    %291 = vmatpush1.msra.mxu0 0.0
    %292 = vmatprep.subr.mxu0 0.0
    %293 = vmatpush1.msra.mxu0 0.0
    %294 = vmatprep.subr.mxu0 0.0
    %295 = vmatpush1.msra.mxu0 0.0
    %296 = vmatprep.subr.mxu0 0.0
    %297 = vmatpush1.msra.mxu0 0.0
    %298 = vmatprep.subr.mxu0 0.0
    %299 = vmatpush1.msra.mxu0 0.0
    %300 = vmatprep.subr.mxu0 0.0
    %301 = vmatpush1.msra.mxu0 0.0
    %302 = vmatprep.subr.mxu0 0.0
    %303 = vmatpush1.msra.mxu0 0.0
    %304 = vmatprep.subr.mxu0 0.0
    %305 = vmatpush1.msra.mxu0 0.0
    %306 = vmatprep.subr.mxu0 0.0
    %307 = vmatpush1.msra.mxu0 0.0
    %308 = vmatprep.subr.mxu0 0.0
    %309 = vmatpush1.msra.mxu0 0.0
    %310 = vmatprep.subr.mxu0 0.0
    %311 = vmatpush1.msra.mxu0 0.0
    %312 = vmatprep.subr.mxu0 0.0
    %313 = vmatpush1.msra.mxu0 0.0
    %314 = vmatprep.subr.mxu0 0.0
    %315 = vmatpush1.msra.mxu0 0.0
    %316 = vmatprep.subr.mxu0 0.0
    %317 = vmatpush1.msra.mxu0 0.0
    %318 = vmatprep.subr.mxu0 0.0
    %319 = vmatpush1.msra.mxu0 0.0
    %320 = vmatprep.subr.mxu0 0.0
    %321 = vmatpush1.msra.mxu0 0.0
    %322 = vmatprep.subr.mxu0 0.0
    %323 = vmatpush1.msra.mxu0 0.0
    %324 = vmatprep.subr.mxu0 0.0
    %325 = vmatpush1.msra.mxu0 0.0
    %326 = vmatprep.subr.mxu0 0.0
    %327 = vmatpush1.msra.mxu0 0.0
    %328 = vmatprep.subr.mxu0 0.0
    %329 = vmatpush1.msra.mxu0 0.0
    %330 = vmatprep.subr.mxu0 0.0
    %331 = vmatpush1.msra.mxu0 0.0
    %332 = vmatprep.subr.mxu0 0.0
    %333 = vmatpush1.msra.mxu0 0.0
    %334 = vmatprep.subr.mxu0 0.0
    %335 = vmatpush1.msra.mxu0 0.0
    %336 = vmatprep.subr.mxu0 0.0
    %337 = vmatpush1.msra.mxu0 0.0
    %338 = vmatprep.subr.mxu0 0.0
    %339 = vmatpush1.msra.mxu0 0.0
    %340 = vmatprep.subr.mxu0 0.0
    %341 = vmatpush1.msra.mxu0 0.0
    %342 = vmatprep.subr.mxu0 0.0
    %343 = vmatpush1.msra.mxu0 0.0
    %344 = vmatprep.subr.mxu0 0.0
    %345 = vmatpush1.msra.mxu0 0.0
    %346 = vmatprep.subr.mxu0 0.0
    %347 = vmatpush1.msra.mxu0 0.0
    %348 = vmatprep.subr.mxu0 0.0
    %349 = vmatpush1.msra.mxu0 0.0
    %350 = vmatprep.subr.mxu0 0.0
    %351 = vmatpush1.msra.mxu0 0.0
    %352 = vmatprep.mubr.f32.mxu0 0.0
    %353 = vmatmul.mubr.f32.gmra.mrb[0].mxu0 %v282
    %v354 = vpop.f32.mrb[0].mxu0
    %v355 = vadd.f32 0.0, %v354
    %v356 = vpop.f32.mrb[0].mxu0
    %v357 = vadd.f32 0.0, %v356
    %358 = vdwg.mxu0
    %v359 = vld [vmem:[%s5] sm:$0xff]
    %v360 = vld [vmem:[%s5 + $0x8] sm:$0xff]
    %v361 = vld [vmem:[%s5 + $0x10] sm:$0xff]
    %v362 = vld [vmem:[%s5 + $0x18] sm:$0xff]
    %v363 = vld [vmem:[%s5 + $0x20] sm:$0xff]
    %v364 = vld [vmem:[%s5 + $0x28] sm:$0xff]
    %v365 = vld [vmem:[%s5 + $0x30] sm:$0xff]
    %v366 = vld [vmem:[%s5 + $0x38] sm:$0xff]
    %v367 = vld [vmem:[%s5 + $0x40] sm:$0xff]
    %v368 = vld [vmem:[%s5 + $0x48] sm:$0xff]
    %v369 = vld [vmem:[%s5 + $0x50] sm:$0xff]
    %v370 = vld [vmem:[%s5 + $0x58] sm:$0xff]
    %v371 = vld [vmem:[%s5 + $0x60] sm:$0xff]
    %v372 = vld [vmem:[%s5 + $0x68] sm:$0xff]
    %v373 = vld [vmem:[%s5 + $0x70] sm:$0xff]
    %v374 = vld [vmem:[%s5 + $0x78] sm:$0xff]
    %v375 = vld [vmem:[%s5 + $0x80] sm:$0xff]
    %v376 = vld [vmem:[%s5 + $0x88] sm:$0xff]
    %v377 = vld [vmem:[%s5 + $0x90] sm:$0xff]
    %v378 = vld [vmem:[%s5 + $0x98] sm:$0xff]
    %v379 = vld [vmem:[%s5 + $0xa0] sm:$0xff]
    %v380 = vld [vmem:[%s5 + $0xa8] sm:$0xff]
    %v381 = vld [vmem:[%s5 + $0xb0] sm:$0xff]
    %v382 = vld [vmem:[%s5 + $0xb8] sm:$0xff]
    %v383 = vld [vmem:[%s5 + $0xc0] sm:$0xff]
    %v384 = vld [vmem:[%s5 + $0xc8] sm:$0xff]
    %v385 = vld [vmem:[%s5 + $0xd0] sm:$0xff]
    %v386 = vld [vmem:[%s5 + $0xd8] sm:$0xff]
    %v387 = vld [vmem:[%s5 + $0xe0] sm:$0xff]
    %v388 = vld [vmem:[%s5 + $0xe8] sm:$0xff]
    %v389 = vld [vmem:[%s5 + $0xf0] sm:$0xff]
    %v390 = vld [vmem:[%s5 + $0xf8] sm:$0xff]
    %v391 = vld [vmem:[%s4] sm:$0x3]
    %393 = vset.pattern.permute.xlu0 0
    %394 = vperm.xlu0 %393, %v391
    %v395 = vpop.permute.xlu0 %394
    %397 = vmatprep.subr.mxu0 0.0
    %398 = vmatpush1.msra.mxu0 %v359
    %399 = vmatprep.subr.mxu0 0.0
    %400 = vmatpush1.msra.mxu0 %v360
    %401 = vmatprep.subr.mxu0 0.0
    %402 = vmatpush1.msra.mxu0 %v361
    %403 = vmatprep.subr.mxu0 0.0
    %404 = vmatpush1.msra.mxu0 %v362
    %405 = vmatprep.subr.mxu0 0.0
    %406 = vmatpush1.msra.mxu0 %v363
    %407 = vmatprep.subr.mxu0 0.0
    %408 = vmatpush1.msra.mxu0 %v364
    %409 = vmatprep.subr.mxu0 0.0
    %410 = vmatpush1.msra.mxu0 %v365
    %411 = vmatprep.subr.mxu0 0.0
    %412 = vmatpush1.msra.mxu0 %v366
    %413 = vmatprep.subr.mxu0 0.0
    %414 = vmatpush1.msra.mxu0 %v367
    %415 = vmatprep.subr.mxu0 0.0
    %416 = vmatpush1.msra.mxu0 %v368
    %417 = vmatprep.subr.mxu0 0.0
    %418 = vmatpush1.msra.mxu0 %v369
    %419 = vmatprep.subr.mxu0 0.0
    %420 = vmatpush1.msra.mxu0 %v370
    %421 = vmatprep.subr.mxu0 0.0
    %422 = vmatpush1.msra.mxu0 %v371
    %423 = vmatprep.subr.mxu0 0.0
    %424 = vmatpush1.msra.mxu0 %v372
    %425 = vmatprep.subr.mxu0 0.0
    %426 = vmatpush1.msra.mxu0 %v373
    %427 = vmatprep.subr.mxu0 0.0
    %428 = vmatpush1.msra.mxu0 %v374
    %429 = vmatprep.subr.mxu0 0.0
    %430 = vmatpush1.msra.mxu0 %v375
    %431 = vmatprep.subr.mxu0 0.0
    %432 = vmatpush1.msra.mxu0 %v376
    %433 = vmatprep.subr.mxu0 0.0
    %434 = vmatpush1.msra.mxu0 %v377
    %435 = vmatprep.subr.mxu0 0.0
    %436 = vmatpush1.msra.mxu0 %v378
    %437 = vmatprep.subr.mxu0 0.0
    %438 = vmatpush1.msra.mxu0 %v379
    %439 = vmatprep.subr.mxu0 0.0
    %440 = vmatpush1.msra.mxu0 %v380
    %441 = vmatprep.subr.mxu0 0.0
    %442 = vmatpush1.msra.mxu0 %v381
    %443 = vmatprep.subr.mxu0 0.0
    %444 = vmatpush1.msra.mxu0 %v382
    %445 = vmatprep.subr.mxu0 0.0
    %446 = vmatpush1.msra.mxu0 %v383
    %447 = vmatprep.subr.mxu0 0.0
    %448 = vmatpush1.msra.mxu0 %v384
    %449 = vmatprep.subr.mxu0 0.0
    %450 = vmatpush1.msra.mxu0 %v385
    %451 = vmatprep.subr.mxu0 0.0
    %452 = vmatpush1.msra.mxu0 %v386
    %453 = vmatprep.subr.mxu0 0.0
    %454 = vmatpush1.msra.mxu0 %v387
    %455 = vmatprep.subr.mxu0 0.0
    %456 = vmatpush1.msra.mxu0 %v388
    %457 = vmatprep.subr.mxu0 0.0
    %458 = vmatpush1.msra.mxu0 %v389
    %459 = vmatprep.subr.mxu0 0.0
    %460 = vmatpush1.msra.mxu0 %v390
    %461 = vmatprep.mubr.f32.mxu0 %v357
    %462 = vmatmul.mubr.f32.gmra.mrb[0].mxu0 %v355
    %v463 = vpop.f32.mrb[0].mxu0
    %v464 = vadd.f32 %v395, %v463
    %v465 = vpop.f32.mrb[0].mxu0
    %466 = vdwg.mxu0
    %s467 = scalar_lea.vmem [#allocation2], 2
    %468 = vst.msk [vmem:[%s467] sm:$0x3] %vm245, %v464
    // Predicated region
    $region26: #{tpu_custom_call.1} parent=1 // pred_check
      _
    $region27: #{tpu_custom_call.1} parent=1 // pred_check_branch
      %470 = sbr.rel (0) target = $region29
    $region28: #{tpu_custom_call.1} parent=1 // pred_region
      %s472 = ssub.s32 64, 64
      %473 = vsyncadd [#allocation3], %s472
      %s474 = sshll.u32 [#allocation2], 4
      %s475 = int_to_ptr.vmem [resolvable:$true] %s474
      %480 = dma.vmem_to_hbm [thread:$0]  %s475, 64, %s6, [#allocation3], 32, 32, 2
    $region29: #{tpu_custom_call.1} parent=1 // pred_fallthru
      _
    // Predicated region
    $region30: #{tpu_custom_call.1} parent=1 // pred_check
      _
    $region31: #{tpu_custom_call.1} parent=1 // pred_check_branch
      %482 = sbr.rel (0) target = $region33
    $region32: #{tpu_custom_call.1} parent=1 // pred_region
      %483 = dma.done [#allocation3], 64
    $region33: #{tpu_custom_call.1} parent=1 // pred_fallthru
      _
    %484 = vsyncpa [#allocation3], 1

</llo_original>
